<compile_context>
chip_gen: v6e
topology: v6e:2x2x1
jax: 0.10.0
libtpu: 0.0.40
codegen_flags: <defaults>
</compile_context>

<pallas_src>
import math

import jax
import jax.numpy as jnp
from jax.experimental import pallas as pl
from jax.experimental.pallas import tpu as pltpu


def _round_up(x, m):
    return ((x + m - 1) // m) * m


def _fuse_layer_params(p, batch, eps=1e-5):
    """Fold eval BN into M/bias; pack node params into one sublane-aligned buffer.

    Packed buffer layout (all block starts are multiples of 8 rows):
      [0:D)              W0
      [D:2D)             W1
      [2D:2D+8)          fused bias (row 2D valid)
      [off_m:off_m+BN)   M' (BN-scaled M, tiled over the batch)
      [off_ebd:+BN)      diag(edge_b) tiled over the batch, stored in column 0
    Returns (packed_node_buf, eb_off_blockdiag, static_offsets).
    """
    N, F = p["M"].shape
    D = p["W0"].shape[0]
    BN = batch * N

    scale = p["gamma"] * jax.lax.rsqrt(p["var"] + eps)                 # (1, F)
    m_rep = jnp.tile(p["M"] * scale, (batch, 1))                       # (BN, F)
    bias = (p["bias"] - p["mean"]) * scale + p["beta"]                 # (1, F)

    eb_sym = (p["edge_b"].T + p["edge_b"]) * 0.5                       # (N, N)
    eye_n = jnp.eye(N, dtype=jnp.float32)
    eb_off = eb_sym * (1.0 - eye_n)                                    # diag zeroed
    eb_off_bd = jnp.kron(jnp.eye(batch, dtype=jnp.float32), eb_off)    # (BN, BN) block-diag
    eb_diag = jnp.tile(jnp.diagonal(p["edge_b"])[:, None], (batch, 1)) # (BN, 1)

    off_bias = 2 * D
    off_m = off_bias + 8
    off_ebd = _round_up(off_m + BN, 8)
    rows = _round_up(off_ebd + BN, 8)

    buf = jnp.zeros((rows, F), jnp.float32)
    buf = buf.at[0:D].set(p["W0"])
    buf = buf.at[D:2 * D].set(p["W1"])
    buf = buf.at[off_bias:off_bias + 1].set(bias)
    buf = buf.at[off_m:off_m + BN].set(m_rep)
    buf = buf.at[off_ebd:off_ebd + BN, 0:1].set(eb_diag)

    offs = dict(d=D, bias=off_bias, m=off_m, ebd=off_ebd)
    return buf, eb_off_bd, offs


def _make_kernel(bn, off1, off2, eb_stride):
    """Fused two-layer ResGraphConv kernel; all B graphs handled in one invocation."""

    def kernel(v_ref, e_ref, p1_ref, p2_ref, eboff_ref, out_ref):
        x = v_ref[...]                                    # (BN, D)
        e_bd = e_ref[...]                                 # (BN, BN) block-diag raw edges

        # Symmetrize + diag/off-diag split, done exactly ONCE and shared by both layers.
        e_sym = (e_bd.T + e_bd) * 0.5
        row = jax.lax.broadcasted_iota(jnp.int32, (bn, bn), 0)
        col = jax.lax.broadcasted_iota(jnp.int32, (bn, bn), 1)
        is_diag = row == col
        e_diag = jnp.sum(jnp.where(is_diag, e_sym, 0.0), axis=-1, keepdims=True)  # (BN, 1)
        e_off = jnp.where(is_diag, 0.0, e_sym)                                    # (BN, BN)

        def layer(xin, p_ref, offs, eb_row0):
            d = offs["d"]
            w0 = p_ref[0:d, :]                                        # (d, f)
            w1 = p_ref[d:2 * d, :]                                    # (d, f)
            bias = p_ref[offs["bias"]:offs["bias"] + 1, :]            # (1, f)   BN shift folded
            m_rep = p_ref[offs["m"]:offs["m"] + bn, :]                # (BN, f)  BN scale folded
            eb_diag = p_ref[offs["ebd"]:offs["ebd"] + bn, 0:1]        # (BN, 1)
            eb_off = eboff_ref[eb_row0:eb_row0 + bn, :]               # (BN, BN) block-diag

            h0 = jnp.dot(xin, w0, preferred_element_type=jnp.float32)
            h1 = jnp.dot(xin, w1, preferred_element_type=jnp.float32)
            mh0 = m_rep * h0
            mh1 = m_rep * h1
            out = ((e_diag + eb_diag) * mh0                           # diagonal term on the VPU
                   + jnp.dot(e_off + eb_off, mh1,                     # off-diag aggregation, MXU
                             preferred_element_type=jnp.float32)
                   + bias)
            return jnp.maximum(out, 0.0)                              # ReLU (dropout = id in eval)

        x1 = layer(x, p1_ref, off1, 0)                    # (BN, H)
        x2 = layer(x1, p2_ref, off2, eb_stride)           # (BN, F)
        out_ref[...] = x2 + x                             # residual add (requires F == D)

    return kernel


def res_graph_conv(v, e, params1, params2):
    """ResGraphConv.forward: v + gconv2(gconv1(v, e), e), fused into one Pallas call."""
    B, N, D = v.shape
    F = params2["M"].shape[1]
    assert F == D, "residual add requires output_dim == input_dim"
    BN = B * N

    p1, ebo1, off1 = _fuse_layer_params(params1, B)
    p2, ebo2, off2 = _fuse_layer_params(params2, B)

    # Block-diagonal raw edge matrix: block (b, b) = e[b]; cross-graph blocks exact zeros.
    eye_b = jnp.eye(B, dtype=v.dtype)
    e_bd = (e[:, :, None, :] * eye_b[:, None, :, None]).reshape(BN, BN)

    # Both layers' off-diagonal edge-bias (block-diag, symmetrized) stacked into one slab.
    eb_stride = _round_up(BN, 8)
    eboff = jnp.zeros((2 * eb_stride, BN), jnp.float32)
    eboff = eboff.at[0:BN].set(ebo1).at[eb_stride:eb_stride + BN].set(ebo2)

    v_flat = v.reshape(BN, D)

    kernel = _make_kernel(BN, off1, off2, eb_stride)
    vmem_spec = pl.BlockSpec(memory_space=pltpu.MemorySpace.VMEM)
    out_flat = pl.pallas_call(
        kernel,
        out_shape=jax.ShapeDtypeStruct((BN, F), jnp.float32),
        in_specs=[vmem_spec] * 5,
        out_specs=vmem_spec,
        compiler_params=pltpu.CompilerParams(vmem_limit_bytes=16 * 1024 * 1024),
    )(v_flat, e_bd, p1, p2, eboff)
    return out_flat.reshape(B, N, F)


def init_graphconv_params(key, in_f, out_f, n):
    """Deterministic init mirroring _GraphConv.__init__ + BatchNorm1d defaults."""
    k1, k2, k3 = jax.random.split(key, 3)
    gain = 1.414
    # W: (2, in_f, out_f); xavier_uniform (PyTorch fan_in=in_f*out_f, fan_out=2*out_f)
    bw = gain * math.sqrt(6.0 / (in_f * out_f + 2 * out_f))
    W = jax.random.uniform(k1, (2, in_f, out_f), jnp.float32, -bw, bw)
    # M: (n, out_f); xavier_uniform (fan_in=out_f, fan_out=n)
    bm = gain * math.sqrt(6.0 / (n + out_f))
    M = jax.random.uniform(k2, (n, out_f), jnp.float32, -bm, bm)
    edge_b = jnp.full((n, n), 1e-6, jnp.float32)
    stdv = 1.0 / math.sqrt(out_f)
    bias = jax.random.uniform(k3, (1, out_f), jnp.float32, -stdv, stdv)
    return dict(
        W0=W[0], W1=W[1], M=M, edge_b=edge_b, bias=bias,
        gamma=jnp.ones((1, out_f), jnp.float32),
        beta=jnp.zeros((1, out_f), jnp.float32),
        mean=jnp.zeros((1, out_f), jnp.float32),
        var=jnp.ones((1, out_f), jnp.float32),
    )


def _graphconv_ref(v, e, p, eps=1e-5):
    """Pure-JAX reference for one GraphConv layer (unfused, matches PyTorch math)."""
    h0 = v @ p["W0"]
    h1 = v @ p["W1"]
    ef = e + p["edge_b"]
    ef = (jnp.swapaxes(ef, -1, -2) + ef) * 0.5
    eye = jnp.eye(e.shape[-1], dtype=v.dtype)
    out = (jnp.einsum("bij,bjf->bif", ef * eye, p["M"] * h0)
           + jnp.einsum("bij,bjf->bif", ef * (1.0 - eye), p["M"] * h1))
    out = out + p["bias"]
    out = (out - p["mean"]) * jax.lax.rsqrt(p["var"] + eps) * p["gamma"] + p["beta"]
    return jnp.maximum(out, 0.0)


if __name__ == "__main__":
    # Small shapes consistent with the module: node_number=6, feature dims 16/32.
    B, N = 2, 6
    INPUT_DIM = OUTPUT_DIM = 16   # residual add requires output_dim == input_dim
    HIDDEN_DIM = 32

    key = jax.random.PRNGKey(0)
    kv, ke, kp1, kp2 = jax.random.split(key, 4)

    v = jax.random.normal(kv, (B, N, INPUT_DIM), jnp.float32)
    e = jax.random.uniform(ke, (B, N, N), jnp.float32)   # UWB distances

    params1 = init_graphconv_params(kp1, INPUT_DIM, HIDDEN_DIM, N)
    params2 = init_graphconv_params(kp2, HIDDEN_DIM, OUTPUT_DIM, N)

    out = res_graph_conv(v, e, params1, params2)
    out = jax.block_until_ready(out)
    assert out.shape == (B, N, OUTPUT_DIM), out.shape

    # Correctness check against the unfused pure-JAX reference.
    ref = v + _graphconv_ref(_graphconv_ref(v, e, params1), e, params2)
    assert bool(jnp.allclose(out, ref, atol=1e-3, rtol=1e-3)), "mismatch vs reference"

    print("KERNEL_OK")
</pallas_src>

<mosaic_0001>
module attributes {stable_mosaic.version = 11 : i64} {
  func.func @kernel(%arg0: memref<12x16xf32, #tpu.memory_space<vmem>>, %arg1: memref<12x12xf32, #tpu.memory_space<vmem>>, %arg2: memref<72x32xf32, #tpu.memory_space<vmem>>, %arg3: memref<104x16xf32, #tpu.memory_space<vmem>>, %arg4: memref<32x12xf32, #tpu.memory_space<vmem>>, %arg5: memref<12x16xf32, #tpu.memory_space<vmem>>) attributes {dimension_semantics = [], scalar_prefetch = 0 : i64, scratch_operands = 0 : i64, tpu.core_type = #tpu.core_type<tc>} {
    %c0 = arith.constant 0 : index
    %c0_0 = arith.constant 0 : index
    %0 = vector.load %arg0[%c0, %c0_0] : memref<12x16xf32, #tpu.memory_space<vmem>>, vector<12x16xf32>
    %c0_1 = arith.constant 0 : index
    %c0_2 = arith.constant 0 : index
    %1 = vector.load %arg1[%c0_1, %c0_2] : memref<12x12xf32, #tpu.memory_space<vmem>>, vector<12x12xf32>
    %2 = tpu.transpose %1, [1, 0] : vector<12x12xf32> -> vector<12x12xf32>
    %3 = arith.addf %2, %1 : vector<12x12xf32>
    %cst = arith.constant 5.000000e-01 : f32
    %4 = vector.broadcast %cst : f32 to vector<12x12xf32>
    %5 = arith.mulf %3, %4 : vector<12x12xf32>
    %6 = tpu.iota {dimensions = array<i32: 0>} : vector<12x12xi32>
    %7 = tpu.iota {dimensions = array<i32: 1>} : vector<12x12xi32>
    %8 = arith.cmpi eq, %6, %7 : vector<12x12xi32>
    %cst_3 = arith.constant 0.000000e+00 : f32
    %9 = vector.broadcast %cst_3 : f32 to vector<12x12xf32>
    %10 = arith.select %8, %5, %9 : vector<12x12xi1>, vector<12x12xf32>
    %cst_4 = arith.constant dense<0.000000e+00> : vector<12xf32>
    %11 = vector.multi_reduction <add>, %10, %cst_4 [1] : vector<12x12xf32> to vector<12xf32>
    %12 = vector.shape_cast %11 : vector<12xf32> to vector<12x1xf32>
    %cst_5 = arith.constant 0.000000e+00 : f32
    %13 = vector.broadcast %cst_5 : f32 to vector<12x12xf32>
    %14 = arith.select %8, %13, %5 : vector<12x12xi1>, vector<12x12xf32>
    %c0_6 = arith.constant 0 : index
    %c0_7 = arith.constant 0 : index
    %15 = vector.load %arg2[%c0_6, %c0_7] : memref<72x32xf32, #tpu.memory_space<vmem>>, vector<16x32xf32>
    %c16 = arith.constant 16 : index
    %c0_8 = arith.constant 0 : index
    %16 = vector.load %arg2[%c16, %c0_8] : memref<72x32xf32, #tpu.memory_space<vmem>>, vector<16x32xf32>
    %c32 = arith.constant 32 : index
    %c0_9 = arith.constant 0 : index
    %17 = vector.load %arg2[%c32, %c0_9] : memref<72x32xf32, #tpu.memory_space<vmem>>, vector<1x32xf32>
    %c40 = arith.constant 40 : index
    %c0_10 = arith.constant 0 : index
    %18 = vector.load %arg2[%c40, %c0_10] : memref<72x32xf32, #tpu.memory_space<vmem>>, vector<12x32xf32>
    %c56 = arith.constant 56 : index
    %c0_11 = arith.constant 0 : index
    %19 = vector.load %arg2[%c56, %c0_11] : memref<72x32xf32, #tpu.memory_space<vmem>>, vector<12x1xf32>
    %c0_12 = arith.constant 0 : index
    %c0_13 = arith.constant 0 : index
    %20 = vector.load %arg4[%c0_12, %c0_13] : memref<32x12xf32, #tpu.memory_space<vmem>>, vector<12x12xf32>
    %cst_14 = arith.constant dense<0.000000e+00> : vector<12x32xf32>
    %21 = tpu.matmul %0, %15, %cst_14 {dimension_numbers = #tpu.dot_dimension_numbers<[1], [0], [0], [1], [0, 0, 1, 1], [], []>} : vector<12x16xf32>, vector<16x32xf32>, vector<12x32xf32> -> vector<12x32xf32>
    %cst_15 = arith.constant dense<0.000000e+00> : vector<12x32xf32>
    %22 = tpu.matmul %0, %16, %cst_15 {dimension_numbers = #tpu.dot_dimension_numbers<[1], [0], [0], [1], [0, 0, 1, 1], [], []>} : vector<12x16xf32>, vector<16x32xf32>, vector<12x32xf32> -> vector<12x32xf32>
    %23 = arith.mulf %18, %21 : vector<12x32xf32>
    %24 = arith.mulf %18, %22 : vector<12x32xf32>
    %25 = arith.addf %12, %19 : vector<12x1xf32>
    %26 = vector.broadcast %25 : vector<12x1xf32> to vector<12x32xf32>
    %27 = arith.mulf %26, %23 : vector<12x32xf32>
    %28 = arith.addf %14, %20 : vector<12x12xf32>
    %cst_16 = arith.constant dense<0.000000e+00> : vector<12x32xf32>
    %29 = tpu.matmul %28, %24, %cst_16 {dimension_numbers = #tpu.dot_dimension_numbers<[1], [0], [0], [1], [0, 0, 1, 1], [], []>} : vector<12x12xf32>, vector<12x32xf32>, vector<12x32xf32> -> vector<12x32xf32>
    %30 = arith.addf %27, %29 : vector<12x32xf32>
    %31 = vector.broadcast %17 : vector<1x32xf32> to vector<12x32xf32>
    %32 = arith.addf %30, %31 : vector<12x32xf32>
    %cst_17 = arith.constant 0.000000e+00 : f32
    %33 = vector.broadcast %cst_17 : f32 to vector<12x32xf32>
    %34 = arith.maximumf %32, %33 : vector<12x32xf32>
    %c0_18 = arith.constant 0 : index
    %c0_19 = arith.constant 0 : index
    %35 = vector.load %arg3[%c0_18, %c0_19] : memref<104x16xf32, #tpu.memory_space<vmem>>, vector<32x16xf32>
    %c32_20 = arith.constant 32 : index
    %c0_21 = arith.constant 0 : index
    %36 = vector.load %arg3[%c32_20, %c0_21] : memref<104x16xf32, #tpu.memory_space<vmem>>, vector<32x16xf32>
    %c64 = arith.constant 64 : index
    %c0_22 = arith.constant 0 : index
    %37 = vector.load %arg3[%c64, %c0_22] : memref<104x16xf32, #tpu.memory_space<vmem>>, vector<1x16xf32>
    %c72 = arith.constant 72 : index
    %c0_23 = arith.constant 0 : index
    %38 = vector.load %arg3[%c72, %c0_23] : memref<104x16xf32, #tpu.memory_space<vmem>>, vector<12x16xf32>
    %c88 = arith.constant 88 : index
    %c0_24 = arith.constant 0 : index
    %39 = vector.load %arg3[%c88, %c0_24] : memref<104x16xf32, #tpu.memory_space<vmem>>, vector<12x1xf32>
    %c16_25 = arith.constant 16 : index
    %c0_26 = arith.constant 0 : index
    %40 = vector.load %arg4[%c16_25, %c0_26] : memref<32x12xf32, #tpu.memory_space<vmem>>, vector<12x12xf32>
    %cst_27 = arith.constant dense<0.000000e+00> : vector<12x16xf32>
    %41 = tpu.matmul %34, %35, %cst_27 {dimension_numbers = #tpu.dot_dimension_numbers<[1], [0], [0], [1], [0, 0, 1, 1], [], []>} : vector<12x32xf32>, vector<32x16xf32>, vector<12x16xf32> -> vector<12x16xf32>
    %cst_28 = arith.constant dense<0.000000e+00> : vector<12x16xf32>
    %42 = tpu.matmul %34, %36, %cst_28 {dimension_numbers = #tpu.dot_dimension_numbers<[1], [0], [0], [1], [0, 0, 1, 1], [], []>} : vector<12x32xf32>, vector<32x16xf32>, vector<12x16xf32> -> vector<12x16xf32>
    %43 = arith.mulf %38, %41 : vector<12x16xf32>
    %44 = arith.mulf %38, %42 : vector<12x16xf32>
    %45 = arith.addf %12, %39 : vector<12x1xf32>
    %46 = vector.broadcast %45 : vector<12x1xf32> to vector<12x16xf32>
    %47 = arith.mulf %46, %43 : vector<12x16xf32>
    %48 = arith.addf %14, %40 : vector<12x12xf32>
    %cst_29 = arith.constant dense<0.000000e+00> : vector<12x16xf32>
    %49 = tpu.matmul %48, %44, %cst_29 {dimension_numbers = #tpu.dot_dimension_numbers<[1], [0], [0], [1], [0, 0, 1, 1], [], []>} : vector<12x12xf32>, vector<12x16xf32>, vector<12x16xf32> -> vector<12x16xf32>
    %50 = arith.addf %47, %49 : vector<12x16xf32>
    %51 = vector.broadcast %37 : vector<1x16xf32> to vector<12x16xf32>
    %52 = arith.addf %50, %51 : vector<12x16xf32>
    %cst_30 = arith.constant 0.000000e+00 : f32
    %53 = vector.broadcast %cst_30 : f32 to vector<12x16xf32>
    %54 = arith.maximumf %52, %53 : vector<12x16xf32>
    %55 = arith.addf %54, %0 : vector<12x16xf32>
    %c0_31 = arith.constant 0 : index
    %c0_32 = arith.constant 0 : index
    %56 = vector.load %arg5[%c0_31, %c0_32] : memref<12x16xf32, #tpu.memory_space<vmem>>, vector<12x16xf32>
    tpu.vector_store %arg5[%c0_31, %c0_32], %55 {strides = array<i32>} : memref<12x16xf32, #tpu.memory_space<vmem>>, vector<12x16xf32>,
    return
  }
}

</mosaic_0001>

<llo_original>
// kernel: tpu_custom_call.1
$region0: #{tpu_custom_call.1}
  #allocation0 [shape = 'u32[]', space=smem, size = 0x4, offset = 0x4, fixed_abs, tag = 'smem constant byte address 0x4 - core index']
  #allocation1 [shape = 'u32[144,128]{1,0:T(1,128)}', space=vmem, size = 0x12000, scoped, tag = 'internal scratch']
  %s0 = inlined_call_operand.vmem [shape: f32[12,16], index: 0, kind: input, shape index: {}]
  %s1 = inlined_call_operand.vmem [shape: f32[12,12], index: 1, kind: input, shape index: {}]
  %s2 = inlined_call_operand.vmem [shape: f32[72,32], index: 2, kind: input, shape index: {}]
  %s3 = inlined_call_operand.vmem [shape: f32[104,16], index: 3, kind: input, shape index: {}]
  %s4 = inlined_call_operand.vmem [shape: f32[32,12], index: 4, kind: input, shape index: {}]
  %s5 = inlined_call_operand.hbm [shape: f32[12,16], index: 5, kind: output, shape index: {}]
  %s6 = sld [smem:[#allocation0]]
  $region30: #{tpu_custom_call.1} parent=0
    _
  %s8 = ssub.s32 1, %s6
  %s9 = scalar_select 0, %s8, %s6
  $region1: #{tpu_custom_call.1} parent=0
    #allocation2 [shape = 'u8[8192]{0}', space=vmem, size = 0x2000, scoped, tag = 'output window, operand 0, single buffered']
    #allocation3 [shape = 's32[1]{0}', space=sflag, size = 0x4, scoped, tag = 'scoped memory for tpu_custom_call.1']
    %10 = vsyncpa [#allocation3], 0
    // Predicated region
    $region2: #{tpu_custom_call.1} parent=1 // pred_check
      _
    $region3: #{tpu_custom_call.1} parent=1 // pred_check_branch
      %12 = sbr.rel (0) target = $region5
    $region4: #{tpu_custom_call.1} parent=1 // pred_region
      _
    $region5: #{tpu_custom_call.1} parent=1 // pred_fallthru
      _
    // Predicated region
    $region6: #{tpu_custom_call.1} parent=1 // pred_check
      _
    $region7: #{tpu_custom_call.1} parent=1 // pred_check_branch
      %14 = sbr.rel (0) target = $region9
    $region8: #{tpu_custom_call.1} parent=1 // pred_region
      _
    $region9: #{tpu_custom_call.1} parent=1 // pred_fallthru
      _
    // Predicated region
    $region10: #{tpu_custom_call.1} parent=1 // pred_check
      _
    $region11: #{tpu_custom_call.1} parent=1 // pred_check_branch
      %16 = sbr.rel (0) target = $region13
    $region12: #{tpu_custom_call.1} parent=1 // pred_region
      _
    $region13: #{tpu_custom_call.1} parent=1 // pred_fallthru
      _
    // Predicated region
    $region14: #{tpu_custom_call.1} parent=1 // pred_check
      _
    $region15: #{tpu_custom_call.1} parent=1 // pred_check_branch
      %18 = sbr.rel (0) target = $region17
    $region16: #{tpu_custom_call.1} parent=1 // pred_region
      _
    $region17: #{tpu_custom_call.1} parent=1 // pred_fallthru
      _
    // Predicated region
    $region18: #{tpu_custom_call.1} parent=1 // pred_check
      _
    $region19: #{tpu_custom_call.1} parent=1 // pred_check_branch
      %20 = sbr.rel (0) target = $region21
    $region20: #{tpu_custom_call.1} parent=1 // pred_region
      _
    $region21: #{tpu_custom_call.1} parent=1 // pred_fallthru
      _
    %v21 = vld [vmem:[%s0] sm:$0xff]
    %v22 = vld [vmem:[%s0 + $0x8] sm:$0xf]
    %v23 = vld [vmem:[%s1] sm:$0xff]
    %v24 = vld [vmem:[%s1 + $0x8] sm:$0xf]
    %25 = vxpose.xlu0.b32.start [1/16] %v23, 128
    %26 = vxpose.xlu0.b32.cont [2/16] %v24, 128
    %27 = vxpose.xlu0.b32.cont [3/16] 0.0, 128
    %28 = vxpose.xlu0.b32.cont [4/16] 0.0, 128
    %29 = vxpose.xlu0.b32.cont [5/16] 0.0, 128
    %30 = vxpose.xlu0.b32.cont [6/16] 0.0, 128
    %31 = vxpose.xlu0.b32.cont [7/16] 0.0, 128
    %32 = vxpose.xlu0.b32.cont [8/16] 0.0, 128
    %33 = vxpose.xlu0.b32.cont [9/16] 0.0, 128
    %34 = vxpose.xlu0.b32.cont [10/16] 0.0, 128
    %35 = vxpose.xlu0.b32.cont [11/16] 0.0, 128
    %36 = vxpose.xlu0.b32.cont [12/16] 0.0, 128
    %37 = vxpose.xlu0.b32.cont [13/16] 0.0, 128
    %38 = vxpose.xlu0.b32.cont [14/16] 0.0, 128
    %39 = vxpose.xlu0.b32.cont [15/16] 0.0, 128
    %40 = vxpose.xlu0.b32.end [16/16] 0.0, 128
    %v41 = vpop.trf.xlu0
    %v42 = vpop.trf.xlu0
    %v43 = vpop.trf.xlu0
    %v44 = vpop.trf.xlu0
    %v45 = vpop.trf.xlu0
    %v46 = vpop.trf.xlu0
    %v47 = vpop.trf.xlu0
    %v48 = vpop.trf.xlu0
    %v49 = vpop.trf.xlu0
    %v50 = vpop.trf.xlu0
    %v51 = vpop.trf.xlu0
    %v52 = vpop.trf.xlu0
    %v53 = vpop.trf.xlu0
    %v54 = vpop.trf.xlu0
    %v55 = vpop.trf.xlu0
    %v56 = vpop.trf.xlu0
    %v57 = vadd.f32 %v41, %v23
    %v58 = vadd.f32 %v42, %v24
    %v59 = vmul.f32 %v57, 0.5
    %v60 = vmul.f32 %v58, 0.5
    %v61 = vlaneseq
    %v62 = vshrl.u32 %v61, 7
    %v63 = vadd.s32 %v62, 8
    %v64 = vlaneseq
    %v65 = vand.u32 %v64, 127
    %vm66 = vcmp.eq.s32.totalorder %v62, %v65
    %vm67 = vcmp.eq.s32.totalorder %v63, %v65
    %v68 = vsel %vm66, %v59, 0.0
    %v69 = vsel %vm67, %v60, 0.0
    %vm70 = vcmask 97280
    %v71 = vsel %vm70, %v68, 0.0
    %72 = vadd.xlane.f32.xlu0 %v71
    %v73 = vpop.xlane.xlu0 %72
    %vm74 = vcmask 93184
    %v75 = vsel %vm74, %v69, 0.0
    %76 = vadd.xlane.f32.xlu0 %v75
    %v77 = vpop.xlane.xlu0 %76
    %v78 = vsel %vm66, 0.0, %v59
    %v79 = vsel %vm67, 0.0, %v60
    %v80 = vld [vmem:[%s2] sm:$0xff]
    %v81 = vld [vmem:[%s2 + $0x8] sm:$0xff]
    %v82 = vld [vmem:[%s2 + $0x10] sm:$0xff]
    %v83 = vld [vmem:[%s2 + $0x18] sm:$0xff]
    %v84 = vld [vmem:[%s2 + $0x20] sm:$0x1]
    %v85 = vld [vmem:[%s2 + $0x28] sm:$0xff]
    %v86 = vld [vmem:[%s2 + $0x30] sm:$0xf]
    %v87 = vld [vmem:[%s2 + $0x38] sm:$0xff]
    %v88 = vld [vmem:[%s2 + $0x40] sm:$0xf]
    %v89 = vld [vmem:[%s4] sm:$0xff]
    %v90 = vld [vmem:[%s4 + $0x8] sm:$0xf]
    %vm91 = vcmask 130048
    %v93 = vsel %vm91, %v21, 0
    %v96 = vsel %vm91, %v22, 0
    %98 = vmatprep.subr.mxu0 0.0
    %99 = vmatpush1.msra.mxu0 0.0
    %100 = vmatprep.subr.mxu0 0.0
    %101 = vmatpush1.msra.mxu0 0.0
    %102 = vmatprep.subr.mxu0 0.0
    %103 = vmatpush1.msra.mxu0 0.0
    %104 = vmatprep.subr.mxu0 0.0
    %105 = vmatpush1.msra.mxu0 0.0
    %106 = vmatprep.subr.mxu0 0.0
    %107 = vmatpush1.msra.mxu0 0.0
    %108 = vmatprep.subr.mxu0 0.0
    %109 = vmatpush1.msra.mxu0 0.0
    %110 = vmatprep.subr.mxu0 0.0
    %111 = vmatpush1.msra.mxu0 0.0
    %112 = vmatprep.subr.mxu0 0.0
    %113 = vmatpush1.msra.mxu0 0.0
    %114 = vmatprep.subr.mxu0 0.0
    %115 = vmatpush1.msra.mxu0 0.0
    %116 = vmatprep.subr.mxu0 0.0
    %117 = vmatpush1.msra.mxu0 0.0
    %118 = vmatprep.subr.mxu0 0.0
    %119 = vmatpush1.msra.mxu0 0.0
    %120 = vmatprep.subr.mxu0 0.0
    %121 = vmatpush1.msra.mxu0 0.0
    %122 = vmatprep.subr.mxu0 0.0
    %123 = vmatpush1.msra.mxu0 0.0
    %124 = vmatprep.subr.mxu0 0.0
    %125 = vmatpush1.msra.mxu0 0.0
    %126 = vmatprep.subr.mxu0 0.0
    %127 = vmatpush1.msra.mxu0 %v81
    %128 = vmatprep.subr.mxu0 0.0
    %129 = vmatpush1.msra.mxu0 %v80
    %130 = vmatprep.subr.mxu0 0.0
    %131 = vmatpush2.msra.mxu0 0.0
    %132 = vmatprep.subr.mxu0 0.0
    %133 = vmatpush2.msra.mxu0 0.0
    %134 = vmatprep.subr.mxu0 0.0
    %135 = vmatpush2.msra.mxu0 0.0
    %136 = vmatprep.subr.mxu0 0.0
    %137 = vmatpush2.msra.mxu0 0.0
    %138 = vmatprep.subr.mxu0 0.0
    %139 = vmatpush2.msra.mxu0 0.0
    %140 = vmatprep.subr.mxu0 0.0
    %141 = vmatpush2.msra.mxu0 0.0
    %142 = vmatprep.subr.mxu0 0.0
    %143 = vmatpush2.msra.mxu0 0.0
    %144 = vmatprep.subr.mxu0 0.0
    %145 = vmatpush2.msra.mxu0 0.0
    %146 = vmatprep.subr.mxu0 0.0
    %147 = vmatpush2.msra.mxu0 0.0
    %148 = vmatprep.subr.mxu0 0.0
    %149 = vmatpush2.msra.mxu0 0.0
    %150 = vmatprep.subr.mxu0 0.0
    %151 = vmatpush2.msra.mxu0 0.0
    %152 = vmatprep.subr.mxu0 0.0
    %153 = vmatpush2.msra.mxu0 0.0
    %154 = vmatprep.subr.mxu0 0.0
    %155 = vmatpush2.msra.mxu0 0.0
    %156 = vmatprep.subr.mxu0 0.0
    %157 = vmatpush2.msra.mxu0 0.0
    %158 = vmatprep.subr.mxu0 0.0
    %159 = vmatpush2.msra.mxu0 0.0
    %160 = vmatprep.subr.mxu0 0.0
    %161 = vmatpush2.msra.mxu0 0.0
    %162 = vmatprep.mubr.f32.mxu0 0.0
    %163 = vmatmul.mubr.f32.gmra.mxu0 %v93
    %v164 = vpop.f32.mrf.mxu0
    %v165 = vadd.f32 0.0, %v164
    %v166 = vpop.f32.mrf.mxu0
    %167 = vmatprep.mubr.f32.mxu0 0.0
    %168 = vmatmul.mubr.f32.gmra.mxu0 %v96
    %v169 = vpop.f32.mrf.mxu0
    %v170 = vadd.f32 0.0, %v169
    %v171 = vpop.f32.mrf.mxu0
    %172 = vdwg.mxu0
    %173 = vmatprep.subr.mxu0 0.0
    %174 = vmatpush1.msra.mxu0 0.0
    %175 = vmatprep.subr.mxu0 0.0
    %176 = vmatpush1.msra.mxu0 0.0
    %177 = vmatprep.subr.mxu0 0.0
    %178 = vmatpush1.msra.mxu0 0.0
    %179 = vmatprep.subr.mxu0 0.0
    %180 = vmatpush1.msra.mxu0 0.0
    %181 = vmatprep.subr.mxu0 0.0
    %182 = vmatpush1.msra.mxu0 0.0
    %183 = vmatprep.subr.mxu0 0.0
    %184 = vmatpush1.msra.mxu0 0.0
    %185 = vmatprep.subr.mxu0 0.0
    %186 = vmatpush1.msra.mxu0 0.0
    %187 = vmatprep.subr.mxu0 0.0
    %188 = vmatpush1.msra.mxu0 0.0
    %189 = vmatprep.subr.mxu0 0.0
    %190 = vmatpush1.msra.mxu0 0.0
    %191 = vmatprep.subr.mxu0 0.0
    %192 = vmatpush1.msra.mxu0 0.0
    %193 = vmatprep.subr.mxu0 0.0
    %194 = vmatpush1.msra.mxu0 0.0
    %195 = vmatprep.subr.mxu0 0.0
    %196 = vmatpush1.msra.mxu0 0.0
    %197 = vmatprep.subr.mxu0 0.0
    %198 = vmatpush1.msra.mxu0 0.0
    %199 = vmatprep.subr.mxu0 0.0
    %200 = vmatpush1.msra.mxu0 0.0
    %201 = vmatprep.subr.mxu0 0.0
    %202 = vmatpush1.msra.mxu0 %v83
    %203 = vmatprep.subr.mxu0 0.0
    %204 = vmatpush1.msra.mxu0 %v82
    %205 = vmatprep.subr.mxu0 0.0
    %206 = vmatpush2.msra.mxu0 0.0
    %207 = vmatprep.subr.mxu0 0.0
    %208 = vmatpush2.msra.mxu0 0.0
    %209 = vmatprep.subr.mxu0 0.0
    %210 = vmatpush2.msra.mxu0 0.0
    %211 = vmatprep.subr.mxu0 0.0
    %212 = vmatpush2.msra.mxu0 0.0
    %213 = vmatprep.subr.mxu0 0.0
    %214 = vmatpush2.msra.mxu0 0.0
    %215 = vmatprep.subr.mxu0 0.0
    %216 = vmatpush2.msra.mxu0 0.0
    %217 = vmatprep.subr.mxu0 0.0
    %218 = vmatpush2.msra.mxu0 0.0
    %219 = vmatprep.subr.mxu0 0.0
    %220 = vmatpush2.msra.mxu0 0.0
    %221 = vmatprep.subr.mxu0 0.0
    %222 = vmatpush2.msra.mxu0 0.0
    %223 = vmatprep.subr.mxu0 0.0
    %224 = vmatpush2.msra.mxu0 0.0
    %225 = vmatprep.subr.mxu0 0.0
    %226 = vmatpush2.msra.mxu0 0.0
    %227 = vmatprep.subr.mxu0 0.0
    %228 = vmatpush2.msra.mxu0 0.0
    %229 = vmatprep.subr.mxu0 0.0
    %230 = vmatpush2.msra.mxu0 0.0
    %231 = vmatprep.subr.mxu0 0.0
    %232 = vmatpush2.msra.mxu0 0.0
    %233 = vmatprep.subr.mxu0 0.0
    %234 = vmatpush2.msra.mxu0 0.0
    %235 = vmatprep.subr.mxu0 0.0
    %236 = vmatpush2.msra.mxu0 0.0
    %237 = vmatprep.mubr.f32.mxu0 0.0
    %238 = vmatmul.mubr.f32.gmra.mxu0 %v93
    %v239 = vpop.f32.mrf.mxu0
    %v240 = vadd.f32 0.0, %v239
    %v241 = vpop.f32.mrf.mxu0
    %242 = vmatprep.mubr.f32.mxu0 0.0
    %243 = vmatmul.mubr.f32.gmra.mxu0 %v96
    %v244 = vpop.f32.mrf.mxu0
    %v245 = vadd.f32 0.0, %v244
    %v246 = vpop.f32.mrf.mxu0
    %247 = vdwg.mxu0
    %v248 = vmul.f32 %v85, %v165
    %v249 = vmul.f32 %v86, %v170
    %v250 = vmul.f32 %v85, %v240
    %v251 = vmul.f32 %v86, %v245
    %v252 = vadd.f32 %v73, %v87
    %v253 = vadd.f32 %v77, %v88
    %255 = vset.pattern.permute.xlu0 0
    %256 = vperm.xlu0 %255, %v252
    %v257 = vpop.permute.xlu0 %256
    %260 = vset.pattern.permute.xlu0 0
    %261 = vperm.xlu0 %260, %v253
    %v262 = vpop.permute.xlu0 %261
    %v264 = vmul.f32 %v257, %v248
    %v265 = vmul.f32 %v262, %v249
    %v266 = vadd.f32 %v78, %v89
    %v267 = vadd.f32 %v79, %v90
    %v269 = vsel %vm70, %v266, 0
    %v272 = vsel %vm70, %v267, 0
    %vm274 = vcmask 1043456
    %v276 = vsel %vm274, %v251, 0
    %278 = vmatprep.subr.mxu0 0.0
    %279 = vmatpush1.msra.mxu0 0.0
    %280 = vmatprep.subr.mxu0 0.0
    %281 = vmatpush1.msra.mxu0 0.0
    %282 = vmatprep.subr.mxu0 0.0
    %283 = vmatpush1.msra.mxu0 0.0
    %284 = vmatprep.subr.mxu0 0.0
    %285 = vmatpush1.msra.mxu0 0.0
    %286 = vmatprep.subr.mxu0 0.0
    %287 = vmatpush1.msra.mxu0 0.0
    %288 = vmatprep.subr.mxu0 0.0
    %289 = vmatpush1.msra.mxu0 0.0
    %290 = vmatprep.subr.mxu0 0.0
    %291 = vmatpush1.msra.mxu0 0.0
    %292 = vmatprep.subr.mxu0 0.0
    %293 = vmatpush1.msra.mxu0 0.0
    %294 = vmatprep.subr.mxu0 0.0
    %295 = vmatpush1.msra.mxu0 0.0
    %296 = vmatprep.subr.mxu0 0.0
    %297 = vmatpush1.msra.mxu0 0.0
    %298 = vmatprep.subr.mxu0 0.0
    %299 = vmatpush1.msra.mxu0 0.0
    %300 = vmatprep.subr.mxu0 0.0
    %301 = vmatpush1.msra.mxu0 0.0
    %302 = vmatprep.subr.mxu0 0.0
    %303 = vmatpush1.msra.mxu0 0.0
    %304 = vmatprep.subr.mxu0 0.0
    %305 = vmatpush1.msra.mxu0 0.0
    %306 = vmatprep.subr.mxu0 0.0
    %307 = vmatpush1.msra.mxu0 %v276
    %308 = vmatprep.subr.mxu0 0.0
    %309 = vmatpush1.msra.mxu0 %v250
    %310 = vmatprep.subr.mxu0 0.0
    %311 = vmatpush2.msra.mxu0 0.0
    %312 = vmatprep.subr.mxu0 0.0
    %313 = vmatpush2.msra.mxu0 0.0
    %314 = vmatprep.subr.mxu0 0.0
    %315 = vmatpush2.msra.mxu0 0.0
    %316 = vmatprep.subr.mxu0 0.0
    %317 = vmatpush2.msra.mxu0 0.0
    %318 = vmatprep.subr.mxu0 0.0
    %319 = vmatpush2.msra.mxu0 0.0
    %320 = vmatprep.subr.mxu0 0.0
    %321 = vmatpush2.msra.mxu0 0.0
    %322 = vmatprep.subr.mxu0 0.0
    %323 = vmatpush2.msra.mxu0 0.0
    %324 = vmatprep.subr.mxu0 0.0
    %325 = vmatpush2.msra.mxu0 0.0
    %326 = vmatprep.subr.mxu0 0.0
    %327 = vmatpush2.msra.mxu0 0.0
    %328 = vmatprep.subr.mxu0 0.0
    %329 = vmatpush2.msra.mxu0 0.0
    %330 = vmatprep.subr.mxu0 0.0
    %331 = vmatpush2.msra.mxu0 0.0
    %332 = vmatprep.subr.mxu0 0.0
    %333 = vmatpush2.msra.mxu0 0.0
    %334 = vmatprep.subr.mxu0 0.0
    %335 = vmatpush2.msra.mxu0 0.0
    %336 = vmatprep.subr.mxu0 0.0
    %337 = vmatpush2.msra.mxu0 0.0
    %338 = vmatprep.subr.mxu0 0.0
    %339 = vmatpush2.msra.mxu0 0.0
    %340 = vmatprep.subr.mxu0 0.0
    %341 = vmatpush2.msra.mxu0 0.0
    %342 = vmatprep.mubr.f32.mxu0 0.0
    %343 = vmatmul.mubr.f32.gmra.mxu0 %v269
    %v344 = vpop.f32.mrf.mxu0
    %v345 = vadd.f32 0.0, %v344
    %v346 = vpop.f32.mrf.mxu0
    %347 = vmatprep.mubr.f32.mxu0 0.0
    %348 = vmatmul.mubr.f32.gmra.mxu0 %v272
    %v349 = vpop.f32.mrf.mxu0
    %v350 = vadd.f32 0.0, %v349
    %v351 = vpop.f32.mrf.mxu0
    %352 = vdwg.mxu0
    %v353 = vadd.f32 %v264, %v345
    %v354 = vadd.f32 %v265, %v350
    %v355 = vlaneseq
    %v356 = vshrl.u32 %v355, 7
    %v357 = vsub.s32 0, %v356
    %v358 = vrot.slane %v84, %v357
    %v359 = vadd.f32 %v353, %v358
    %v360 = vadd.f32 %v354, %v358
    %v361 = vmax.f32 %v359, 0.0
    %v362 = vmax.f32 %v360, 0.0
    %v363 = vld [vmem:[%s3] sm:$0xff]
    %v364 = vld [vmem:[%s3 + $0x8] sm:$0xff]
    %v365 = vld [vmem:[%s3 + $0x10] sm:$0xff]
    %v366 = vld [vmem:[%s3 + $0x18] sm:$0xff]
    %v367 = vld [vmem:[%s3 + $0x20] sm:$0xff]
    %v368 = vld [vmem:[%s3 + $0x28] sm:$0xff]
    %v369 = vld [vmem:[%s3 + $0x30] sm:$0xff]
    %v370 = vld [vmem:[%s3 + $0x38] sm:$0xff]
    %v371 = vld [vmem:[%s3 + $0x40] sm:$0x1]
    %v372 = vld [vmem:[%s3 + $0x48] sm:$0xff]
    %v373 = vld [vmem:[%s3 + $0x50] sm:$0xf]
    %v374 = vld [vmem:[%s3 + $0x58] sm:$0xff]
    %v375 = vld [vmem:[%s3 + $0x60] sm:$0xf]
    %v376 = vld [vmem:[%s4 + $0x10] sm:$0xff]
    %v377 = vld [vmem:[%s4 + $0x18] sm:$0xf]
    %vm378 = vcmask 261120
    %v380 = vsel %vm378, %v361, 0
    %v383 = vsel %vm378, %v362, 0
    %385 = vmatprep.subr.mxu0 0.0
    %386 = vmatpush1.msra.mxu0 0.0
    %387 = vmatprep.subr.mxu0 0.0
    %388 = vmatpush1.msra.mxu0 0.0
    %389 = vmatprep.subr.mxu0 0.0
    %390 = vmatpush1.msra.mxu0 0.0
    %391 = vmatprep.subr.mxu0 0.0
    %392 = vmatpush1.msra.mxu0 0.0
    %393 = vmatprep.subr.mxu0 0.0
    %394 = vmatpush1.msra.mxu0 0.0
    %395 = vmatprep.subr.mxu0 0.0
    %396 = vmatpush1.msra.mxu0 0.0
    %397 = vmatprep.subr.mxu0 0.0
    %398 = vmatpush1.msra.mxu0 0.0
    %399 = vmatprep.subr.mxu0 0.0
    %400 = vmatpush1.msra.mxu0 0.0
    %401 = vmatprep.subr.mxu0 0.0
    %402 = vmatpush1.msra.mxu0 0.0
    %403 = vmatprep.subr.mxu0 0.0
    %404 = vmatpush1.msra.mxu0 0.0
    %405 = vmatprep.subr.mxu0 0.0
    %406 = vmatpush1.msra.mxu0 0.0
    %407 = vmatprep.subr.mxu0 0.0
    %408 = vmatpush1.msra.mxu0 0.0
    %409 = vmatprep.subr.mxu0 0.0
    %410 = vmatpush1.msra.mxu0 %v366
    %411 = vmatprep.subr.mxu0 0.0
    %412 = vmatpush1.msra.mxu0 %v365
    %413 = vmatprep.subr.mxu0 0.0
    %414 = vmatpush1.msra.mxu0 %v364
    %415 = vmatprep.subr.mxu0 0.0
    %416 = vmatpush1.msra.mxu0 %v363
    %417 = vmatprep.subr.mxu0 0.0
    %418 = vmatpush2.msra.mxu0 0.0
    %419 = vmatprep.subr.mxu0 0.0
    %420 = vmatpush2.msra.mxu0 0.0
    %421 = vmatprep.subr.mxu0 0.0
    %422 = vmatpush2.msra.mxu0 0.0
    %423 = vmatprep.subr.mxu0 0.0
    %424 = vmatpush2.msra.mxu0 0.0
    %425 = vmatprep.subr.mxu0 0.0
    %426 = vmatpush2.msra.mxu0 0.0
    %427 = vmatprep.subr.mxu0 0.0
    %428 = vmatpush2.msra.mxu0 0.0
    %429 = vmatprep.subr.mxu0 0.0
    %430 = vmatpush2.msra.mxu0 0.0
    %431 = vmatprep.subr.mxu0 0.0
    %432 = vmatpush2.msra.mxu0 0.0
    %433 = vmatprep.subr.mxu0 0.0
    %434 = vmatpush2.msra.mxu0 0.0
    %435 = vmatprep.subr.mxu0 0.0
    %436 = vmatpush2.msra.mxu0 0.0
    %437 = vmatprep.subr.mxu0 0.0
    %438 = vmatpush2.msra.mxu0 0.0
    %439 = vmatprep.subr.mxu0 0.0
    %440 = vmatpush2.msra.mxu0 0.0
    %441 = vmatprep.subr.mxu0 0.0
    %442 = vmatpush2.msra.mxu0 0.0
    %443 = vmatprep.subr.mxu0 0.0
    %444 = vmatpush2.msra.mxu0 0.0
    %445 = vmatprep.subr.mxu0 0.0
    %446 = vmatpush2.msra.mxu0 0.0
    %447 = vmatprep.subr.mxu0 0.0
    %448 = vmatpush2.msra.mxu0 0.0
    %449 = vmatprep.mubr.f32.mxu0 0.0
    %450 = vmatmul.mubr.f32.gmra.mxu0 %v380
    %v451 = vpop.f32.mrf.mxu0
    %v452 = vadd.f32 0.0, %v451
    %v453 = vpop.f32.mrf.mxu0
    %454 = vmatprep.mubr.f32.mxu0 0.0
    %455 = vmatmul.mubr.f32.gmra.mxu0 %v383
    %v456 = vpop.f32.mrf.mxu0
    %v457 = vadd.f32 0.0, %v456
    %v458 = vpop.f32.mrf.mxu0
    %459 = vdwg.mxu0
    %460 = vmatprep.subr.mxu0 0.0
    %461 = vmatpush1.msra.mxu0 0.0
    %462 = vmatprep.subr.mxu0 0.0
    %463 = vmatpush1.msra.mxu0 0.0
    %464 = vmatprep.subr.mxu0 0.0
    %465 = vmatpush1.msra.mxu0 0.0
    %466 = vmatprep.subr.mxu0 0.0
    %467 = vmatpush1.msra.mxu0 0.0
    %468 = vmatprep.subr.mxu0 0.0
    %469 = vmatpush1.msra.mxu0 0.0
    %470 = vmatprep.subr.mxu0 0.0
    %471 = vmatpush1.msra.mxu0 0.0
    %472 = vmatprep.subr.mxu0 0.0
    %473 = vmatpush1.msra.mxu0 0.0
    %474 = vmatprep.subr.mxu0 0.0
    %475 = vmatpush1.msra.mxu0 0.0
    %476 = vmatprep.subr.mxu0 0.0
    %477 = vmatpush1.msra.mxu0 0.0
    %478 = vmatprep.subr.mxu0 0.0
    %479 = vmatpush1.msra.mxu0 0.0
    %480 = vmatprep.subr.mxu0 0.0
    %481 = vmatpush1.msra.mxu0 0.0
    %482 = vmatprep.subr.mxu0 0.0
    %483 = vmatpush1.msra.mxu0 0.0
    %484 = vmatprep.subr.mxu0 0.0
    %485 = vmatpush1.msra.mxu0 %v370
    %486 = vmatprep.subr.mxu0 0.0
    %487 = vmatpush1.msra.mxu0 %v369
    %488 = vmatprep.subr.mxu0 0.0
    %489 = vmatpush1.msra.mxu0 %v368
    %490 = vmatprep.subr.mxu0 0.0
    %491 = vmatpush1.msra.mxu0 %v367
    %492 = vmatprep.subr.mxu0 0.0
    %493 = vmatpush2.msra.mxu0 0.0
    %494 = vmatprep.subr.mxu0 0.0
    %495 = vmatpush2.msra.mxu0 0.0
    %496 = vmatprep.subr.mxu0 0.0
    %497 = vmatpush2.msra.mxu0 0.0
    %498 = vmatprep.subr.mxu0 0.0
    %499 = vmatpush2.msra.mxu0 0.0
    %500 = vmatprep.subr.mxu0 0.0
    %501 = vmatpush2.msra.mxu0 0.0
    %502 = vmatprep.subr.mxu0 0.0
    %503 = vmatpush2.msra.mxu0 0.0
    %504 = vmatprep.subr.mxu0 0.0
    %505 = vmatpush2.msra.mxu0 0.0
    %506 = vmatprep.subr.mxu0 0.0
    %507 = vmatpush2.msra.mxu0 0.0
    %508 = vmatprep.subr.mxu0 0.0
    %509 = vmatpush2.msra.mxu0 0.0
    %510 = vmatprep.subr.mxu0 0.0
    %511 = vmatpush2.msra.mxu0 0.0
    %512 = vmatprep.subr.mxu0 0.0
    %513 = vmatpush2.msra.mxu0 0.0
    %514 = vmatprep.subr.mxu0 0.0
    %515 = vmatpush2.msra.mxu0 0.0
    %516 = vmatprep.subr.mxu0 0.0
    %517 = vmatpush2.msra.mxu0 0.0
    %518 = vmatprep.subr.mxu0 0.0
    %519 = vmatpush2.msra.mxu0 0.0
    %520 = vmatprep.subr.mxu0 0.0
    %521 = vmatpush2.msra.mxu0 0.0
    %522 = vmatprep.subr.mxu0 0.0
    %523 = vmatpush2.msra.mxu0 0.0
    %524 = vmatprep.mubr.f32.mxu0 0.0
    %525 = vmatmul.mubr.f32.gmra.mxu0 %v380
    %v526 = vpop.f32.mrf.mxu0
    %v527 = vadd.f32 0.0, %v526
    %v528 = vpop.f32.mrf.mxu0
    %529 = vmatprep.mubr.f32.mxu0 0.0
    %530 = vmatmul.mubr.f32.gmra.mxu0 %v383
    %v531 = vpop.f32.mrf.mxu0
    %v532 = vadd.f32 0.0, %v531
    %v533 = vpop.f32.mrf.mxu0
    %534 = vdwg.mxu0
    %v535 = vmul.f32 %v372, %v452
    %v536 = vmul.f32 %v373, %v457
    %v537 = vmul.f32 %v372, %v527
    %v538 = vmul.f32 %v373, %v532
    %v539 = vadd.f32 %v73, %v374
    %v540 = vadd.f32 %v77, %v375
    %542 = vset.pattern.permute.xlu0 0
    %543 = vperm.xlu0 %542, %v539
    %v544 = vpop.permute.xlu0 %543
    %547 = vset.pattern.permute.xlu0 0
    %548 = vperm.xlu0 %547, %v540
    %v549 = vpop.permute.xlu0 %548
    %v551 = vmul.f32 %v544, %v535
    %v552 = vmul.f32 %v549, %v536
    %v553 = vadd.f32 %v78, %v376
    %v554 = vadd.f32 %v79, %v377
    %v556 = vsel %vm70, %v553, 0
    %v559 = vsel %vm70, %v554, 0
    %v562 = vsel %vm274, %v538, 0
    %564 = vmatprep.subr.mxu0 0.0
    %565 = vmatpush1.msra.mxu0 0.0
    %566 = vmatprep.subr.mxu0 0.0
    %567 = vmatpush1.msra.mxu0 0.0
    %568 = vmatprep.subr.mxu0 0.0
    %569 = vmatpush1.msra.mxu0 0.0
    %570 = vmatprep.subr.mxu0 0.0
    %571 = vmatpush1.msra.mxu0 0.0
    %572 = vmatprep.subr.mxu0 0.0
    %573 = vmatpush1.msra.mxu0 0.0
    %574 = vmatprep.subr.mxu0 0.0
    %575 = vmatpush1.msra.mxu0 0.0
    %576 = vmatprep.subr.mxu0 0.0
    %577 = vmatpush1.msra.mxu0 0.0
    %578 = vmatprep.subr.mxu0 0.0
    %579 = vmatpush1.msra.mxu0 0.0
    %580 = vmatprep.subr.mxu0 0.0
    %581 = vmatpush1.msra.mxu0 0.0
    %582 = vmatprep.subr.mxu0 0.0
    %583 = vmatpush1.msra.mxu0 0.0
    %584 = vmatprep.subr.mxu0 0.0
    %585 = vmatpush1.msra.mxu0 0.0
    %586 = vmatprep.subr.mxu0 0.0
    %587 = vmatpush1.msra.mxu0 0.0
    %588 = vmatprep.subr.mxu0 0.0
    %589 = vmatpush1.msra.mxu0 0.0
    %590 = vmatprep.subr.mxu0 0.0
    %591 = vmatpush1.msra.mxu0 0.0
    %592 = vmatprep.subr.mxu0 0.0
    %593 = vmatpush1.msra.mxu0 %v562
    %594 = vmatprep.subr.mxu0 0.0
    %595 = vmatpush1.msra.mxu0 %v537
    %596 = vmatprep.subr.mxu0 0.0
    %597 = vmatpush2.msra.mxu0 0.0
    %598 = vmatprep.subr.mxu0 0.0
    %599 = vmatpush2.msra.mxu0 0.0
    %600 = vmatprep.subr.mxu0 0.0
    %601 = vmatpush2.msra.mxu0 0.0
    %602 = vmatprep.subr.mxu0 0.0
    %603 = vmatpush2.msra.mxu0 0.0
    %604 = vmatprep.subr.mxu0 0.0
    %605 = vmatpush2.msra.mxu0 0.0
    %606 = vmatprep.subr.mxu0 0.0
    %607 = vmatpush2.msra.mxu0 0.0
    %608 = vmatprep.subr.mxu0 0.0
    %609 = vmatpush2.msra.mxu0 0.0
    %610 = vmatprep.subr.mxu0 0.0
    %611 = vmatpush2.msra.mxu0 0.0
    %612 = vmatprep.subr.mxu0 0.0
    %613 = vmatpush2.msra.mxu0 0.0
    %614 = vmatprep.subr.mxu0 0.0
    %615 = vmatpush2.msra.mxu0 0.0
    %616 = vmatprep.subr.mxu0 0.0
    %617 = vmatpush2.msra.mxu0 0.0
    %618 = vmatprep.subr.mxu0 0.0
    %619 = vmatpush2.msra.mxu0 0.0
    %620 = vmatprep.subr.mxu0 0.0
    %621 = vmatpush2.msra.mxu0 0.0
    %622 = vmatprep.subr.mxu0 0.0
    %623 = vmatpush2.msra.mxu0 0.0
    %624 = vmatprep.subr.mxu0 0.0
    %625 = vmatpush2.msra.mxu0 0.0
    %626 = vmatprep.subr.mxu0 0.0
    %627 = vmatpush2.msra.mxu0 0.0
    %628 = vmatprep.mubr.f32.mxu0 0.0
    %629 = vmatmul.mubr.f32.gmra.mxu0 %v556
    %v630 = vpop.f32.mrf.mxu0
    %v631 = vadd.f32 0.0, %v630
    %v632 = vpop.f32.mrf.mxu0
    %633 = vmatprep.mubr.f32.mxu0 0.0
    %634 = vmatmul.mubr.f32.gmra.mxu0 %v559
    %v635 = vpop.f32.mrf.mxu0
    %v636 = vadd.f32 0.0, %v635
    %v637 = vpop.f32.mrf.mxu0
    %638 = vdwg.mxu0
    %v639 = vadd.f32 %v551, %v631
    %v640 = vadd.f32 %v552, %v636
    %v641 = vlaneseq
    %v642 = vshrl.u32 %v641, 7
    %v643 = vsub.s32 0, %v642
    %v644 = vrot.slane %v371, %v643
    %v645 = vadd.f32 %v639, %v644
    %v646 = vadd.f32 %v640, %v644
    %v647 = vmax.f32 %v645, 0.0
    %v648 = vmax.f32 %v646, 0.0
    %v649 = vadd.f32 %v647, %v21
    %v650 = vadd.f32 %v648, %v22
    %651 = vst.msk [vmem:[#allocation2] sm:$0xff] %vm91, %v649
    %vm652 = vcmask 125952
    %653 = vst.msk [vmem:[#allocation2 + $0x8] sm:$0xf] %vm652, %v650
    // Predicated region
    $region22: #{tpu_custom_call.1} parent=1 // pred_check
      _
    $region23: #{tpu_custom_call.1} parent=1 // pred_check_branch
      %655 = sbr.rel (0) target = $region25
    $region24: #{tpu_custom_call.1} parent=1 // pred_region
      %s657 = ssub.s32 256, 256
      %658 = vsyncadd [#allocation3], %s657
      %s659 = sshll.u32 [#allocation2], 4
      %s660 = int_to_ptr.vmem [resolvable:$true] %s659
      %665 = dma.vmem_to_hbm [thread:$0]  %s660, 256, %s5, [#allocation3], 128, 128, 8
    $region25: #{tpu_custom_call.1} parent=1 // pred_fallthru
      _
    // Predicated region
    $region26: #{tpu_custom_call.1} parent=1 // pred_check
      _
    $region27: #{tpu_custom_call.1} parent=1 // pred_check_branch
      %667 = sbr.rel (0) target = $region29
    $region28: #{tpu_custom_call.1} parent=1 // pred_region
      %668 = dma.done [#allocation3], 256
    $region29: #{tpu_custom_call.1} parent=1 // pred_fallthru
      _
    %669 = vsyncpa [#allocation3], 1

</llo_original>
